<compile_context>
chip_gen: v7x
topology: tpu7x:2x2x1
jax: 0.10.0
libtpu: 0.0.40
codegen_flags: <defaults>
</compile_context>

<pallas_src>
import functools

import jax
import jax.numpy as jnp
from jax.experimental import pallas as pl
from jax.experimental.pallas import tpu as pltpu


def conv_relu_res_kernel(xm_ref, hal_ref, w_ref, b_ref, o_ref, xcat_ref, *,
                         filter_sz, c_in, tile_t, pad_left, do_res):
    # xm_ref   : (1, C_in, tile_t)         this (batch, time) tile of x
    # hal_ref  : (1, 1, C_in, halo_w)      [left halo (pad_left) | right halo (pad_right)]
    # w_ref    : (C_out, filter_sz*C_in)   taps folded into the contraction dim
    # b_ref    : (C_out, 1)                f32 bias
    # o_ref    : (1, C_out, tile_t)        output tile
    # xcat_ref : (filter_sz*C_in, tile_t)  VMEM scratch: stacked conv operand
    xm = xm_ref[0]             # (C_in, tile_t)
    hal = hal_ref[0, 0]        # (C_in, halo_w)

    # Row block k of the stacked operand holds columns [k, k+tile_t) of the
    # window [left_halo | xm | right_halo].  All slice offsets are static.
    for k in range(filter_sz):
        r0, r1 = k * c_in, (k + 1) * c_in
        if k == pad_left:
            xcat_ref[r0:r1, :] = xm
        elif k < pad_left:
            nl = pad_left - k                       # columns from the left halo
            xcat_ref[r0:r1, :nl] = hal[:, k:pad_left]
            xcat_ref[r0:r1, nl:] = xm[:, :tile_t - nl]
        else:
            nr = k - pad_left                       # columns from the right halo
            xcat_ref[r0:r1, :tile_t - nr] = xm[:, nr:]
            xcat_ref[r0:r1, tile_t - nr:] = hal[:, pad_left:pad_left + nr]

    # Whole Conv1d as ONE MXU matmul (contraction depth = filter_sz*C_in),
    # accumulated in f32; bias / ReLU / residual stay in f32 on the VPU.
    acc = jnp.dot(w_ref[...], xcat_ref[...], preferred_element_type=jnp.float32)
    acc = acc + b_ref[...]                          # (C_out, 1) broadcast over T
    act = jnp.maximum(acc, 0.0)                     # ReLU
    if do_res:
        # stride == 1 => output length == input length; the residual is exactly
        # this x tile, already resident in VMEM (no second HBM read of x).
        act = act + xm.astype(jnp.float32)
    o_ref[0] = act.astype(o_ref.dtype)
    # TODO(synk): frac_zero_act is a module side-effect attribute (never
    # returned by forward); it is not materialized by the kernel.


def conv_relu_res(x, w, b, *, filter_sz, stride=1, do_res=True,
                  compute_dtype=None, tile_t=512):
    """Fused ConvReLURes forward.

    x: (B, C_in, T),  w: (C_out, C_in, filter_sz),  b: (C_out,)
    compute_dtype: dtype for MXU operands / x tiles (e.g. jnp.bfloat16 on
    v5e/v6e); accumulation and the epilogue are always f32.
    """
    assert stride == 1, "residual ConvReLURes requires stride == 1"
    assert tile_t % 128 == 0 and tile_t > 0
    B, C_in, T = x.shape
    C_out = w.shape[0]
    assert w.shape == (C_out, C_in, filter_sz)
    if do_res:
        assert C_out == C_in, "residual add needs n_out_chan == n_in_chan"
    if compute_dtype is None:
        compute_dtype = x.dtype
    out_dtype = x.dtype

    # Padding rule copied from ConvReLURes.__init__ (stride == 1 path).
    if filter_sz % 2 == 0:
        pad_left, pad_right = filter_sz // 2 - 1, filter_sz // 2
    else:
        pad_left = pad_right = (filter_sz - 1) // 2
    halo = filter_sz - 1                  # == pad_left + pad_right
    halo_w = max(halo, 1)

    # Time tiling: lane-dense (multiple of 128) tiles when T allows it,
    # otherwise a single tile covering the whole (small) time axis.
    if T >= 128:
        tile = min(tile_t, ((T + 127) // 128) * 128)
    else:
        tile = T
    assert tile >= filter_sz
    n_t = -(-T // tile)
    Tm = n_t * tile

    # Optional dtype cast + right-pad to a whole number of tiles in a single
    # pass over x (no pass at all when T is tile-aligned and dtype matches).
    xm = x.astype(compute_dtype)
    if Tm > T:
        xm = jnp.pad(xm, ((0, 0), (0, 0), (0, Tm - T)))

    # Tiny per-tile halo side array:
    #   hal[ti] = [last pad_left cols of tile ti-1 | first pad_right cols of
    #              tile ti+1]   (zeros at the sequence boundaries)
    # This keeps every in-kernel slice static and lets the main input stream
    # tile-by-tile with no overlapping / duplicated DMA.
    xm4 = xm.reshape(B, C_in, n_t, tile)
    parts = []
    if pad_left > 0:
        zl = jnp.zeros((B, C_in, 1, pad_left), compute_dtype)
        parts.append(jnp.concatenate([zl, xm4[:, :, :-1, tile - pad_left:]], axis=2))
    if pad_right > 0:
        zr = jnp.zeros((B, C_in, 1, pad_right), compute_dtype)
        parts.append(jnp.concatenate([xm4[:, :, 1:, :pad_right], zr], axis=2))
    if parts:
        hal = parts[0] if len(parts) == 1 else jnp.concatenate(parts, axis=3)
    else:                                  # filter_sz == 1: dummy, never read
        hal = jnp.zeros((B, C_in, n_t, halo_w), compute_dtype)
    hal = jnp.transpose(hal, (2, 0, 1, 3))  # (n_t, B, C_in, halo_w)

    # Fold the filter taps into the contraction dim:
    #   W_stacked[o, k*C_in + c] = w[o, c, k]
    wk = jnp.transpose(w, (0, 2, 1)).reshape(C_out, filter_sz * C_in)
    wk = wk.astype(compute_dtype)
    b2 = b.reshape(C_out, 1).astype(jnp.float32)

    kernel = functools.partial(
        conv_relu_res_kernel, filter_sz=filter_sz, c_in=C_in,
        tile_t=tile, pad_left=pad_left, do_res=do_res)

    # Rough per-step VMEM budget (double-buffered blocks + scratch).
    csize = jnp.dtype(compute_dtype).itemsize
    osize = jnp.dtype(out_dtype).itemsize
    vmem_est = (2 * C_in * tile * csize              # main input block
                + 2 * C_in * 128 * csize             # halo block (lane-padded)
                + 2 * C_out * tile * osize           # output block
                + 2 * C_out * filter_sz * C_in * csize
                + 2 * C_out * 128 * 4                # bias (lane-padded)
                + filter_sz * C_in * tile * csize)   # stacked-operand scratch
    vmem_limit = int(min(max(2 * vmem_est + (4 << 20), 32 << 20), 96 << 20))

    return pl.pallas_call(
        kernel,
        out_shape=jax.ShapeDtypeStruct((B, C_out, T), out_dtype),
        grid=(B, n_t),
        in_specs=[
            pl.BlockSpec((1, C_in, tile), lambda bi, ti: (bi, 0, ti)),
            pl.BlockSpec((1, 1, C_in, halo_w), lambda bi, ti: (ti, bi, 0, 0)),
            pl.BlockSpec((C_out, filter_sz * C_in), lambda bi, ti: (0, 0)),
            pl.BlockSpec((C_out, 1), lambda bi, ti: (0, 0)),
        ],
        out_specs=pl.BlockSpec((1, C_out, tile), lambda bi, ti: (bi, 0, ti)),
        scratch_shapes=[pltpu.VMEM((filter_sz * C_in, tile), compute_dtype)],
        compiler_params=pltpu.CompilerParams(
            dimension_semantics=("parallel", "parallel"),
            vmem_limit_bytes=vmem_limit),
    )(xm, hal, wk, b2)


def reference(x, w, b, *, filter_sz, do_res=True):
    """Pure-JAX reference mirroring the PyTorch forward."""
    if filter_sz % 2 == 0:
        pad_left, pad_right = filter_sz // 2 - 1, filter_sz // 2
    else:
        pad_left = pad_right = (filter_sz - 1) // 2
    xpad = jnp.pad(x, ((0, 0), (0, 0), (pad_left, pad_right)))
    pre = jax.lax.conv_general_dilated(
        xpad, w, window_strides=(1,), padding="VALID",
        dimension_numbers=("NCH", "OIH", "NCH"),
        precision=jax.lax.Precision.HIGHEST)
    pre = pre + b[None, :, None]
    act = jnp.maximum(pre, 0.0)
    if do_res:
        act = act + x
    return act


def _xavier_params(key_w, key_b, n_chan, filter_sz):
    fan_in = fan_out = n_chan * filter_sz
    bound = (6.0 / (fan_in + fan_out)) ** 0.5
    w = jax.random.uniform(key_w, (n_chan, n_chan, filter_sz),
                           dtype=jnp.float32, minval=-bound, maxval=bound)
    b = jax.random.uniform(key_b, (n_chan,), dtype=jnp.float32,
                           minval=-0.1, maxval=0.1)
    return w, b


if __name__ == "__main__":
    key = jax.random.PRNGKey(0)
    kx, kw, kb = jax.random.split(key, 3)

    # 1) Small shape, even filter (asymmetric padding), f32 compute.
    B, C, T, FS = 2, 16, 16, 4
    x = jax.random.normal(kx, (B, C, T), dtype=jnp.float32)
    w, b = _xavier_params(kw, kb, C, FS)

    out = jax.block_until_ready(conv_relu_res(x, w, b, filter_sz=FS))
    ref = reference(x, w, b, filter_sz=FS)
    assert out.shape == (B, C, T)
    assert jnp.allclose(out, ref, atol=1e-5, rtol=1e-5), "f32 mismatch"

    # 2) Same shapes, bf16 MXU/DMA path (f32 accumulation + epilogue).
    out_bf = jax.block_until_ready(
        conv_relu_res(x, w, b, filter_sz=FS, compute_dtype=jnp.bfloat16))
    assert out_bf.shape == (B, C, T) and out_bf.dtype == x.dtype
    assert jnp.allclose(out_bf, ref, atol=7e-2, rtol=5e-2), "bf16 mismatch"

    # 3) Longer sequence: lane-dense multi-tile path, odd filter (symmetric pad).
    T2, FS2 = 300, 3
    kx2, kw2, kb2 = jax.random.split(jax.random.PRNGKey(1), 3)
    x2 = jax.random.normal(kx2, (B, C, T2), dtype=jnp.float32)
    w2, b2 = _xavier_params(kw2, kb2, C, FS2)

    out2 = jax.block_until_ready(
        conv_relu_res(x2, w2, b2, filter_sz=FS2, tile_t=128))
    ref2 = reference(x2, w2, b2, filter_sz=FS2)
    assert out2.shape == (B, C, T2)
    assert jnp.allclose(out2, ref2, atol=1e-5, rtol=1e-5), "tiled mismatch"

    print("KERNEL_OK")
</pallas_src>

<mosaic_0001>
module attributes {stable_mosaic.version = 11 : i64} {
  func.func @conv_relu_res_kernel(%arg0: i32, %arg1: i32, %arg2: memref<1x16x16xf32, #tpu.memory_space<vmem>>, %arg3: memref<1x1x16x3xf32, #tpu.memory_space<vmem>>, %arg4: memref<16x64xf32, #tpu.memory_space<vmem>>, %arg5: memref<16x1xf32, #tpu.memory_space<vmem>>, %arg6: memref<1x16x16xf32, #tpu.memory_space<vmem>>, %arg7: memref<64x16xf32, #tpu.memory_space<vmem>>) attributes {dimension_semantics = [#tpu.dimension_semantics<parallel>, #tpu.dimension_semantics<parallel>], iteration_bounds = array<i64: 2, 1>, scalar_prefetch = 0 : i64, scratch_operands = 1 : i64, tpu.core_type = #tpu.core_type<tc>, window_params = [{transform_indices = @transform_0, window_bounds = array<i64: 1, 16, 16>}, {transform_indices = @transform_1, window_bounds = array<i64: 1, 1, 16, 3>}, {pipeline_mode = #tpu.pipeline_mode<synchronous>, transform_indices = @transform_2, window_bounds = array<i64: 16, 64>}, {pipeline_mode = #tpu.pipeline_mode<synchronous>, transform_indices = @transform_3, window_bounds = array<i64: 16, 1>}, {transform_indices = @transform_4, window_bounds = array<i64: 1, 16, 16>}]} {
    %c0 = arith.constant 0 : index
    %c0_0 = arith.constant 0 : index
    %c0_1 = arith.constant 0 : index
    %0 = vector.load %arg2[%c0, %c0_0, %c0_1] : memref<1x16x16xf32, #tpu.memory_space<vmem>>, vector<1x16x16xf32>
    %1 = vector.shape_cast %0 : vector<1x16x16xf32> to vector<16x16xf32>
    %c0_2 = arith.constant 0 : index
    %c0_3 = arith.constant 0 : index
    %c0_4 = arith.constant 0 : index
    %c0_5 = arith.constant 0 : index
    %2 = vector.load %arg3[%c0_2, %c0_3, %c0_4, %c0_5] : memref<1x1x16x3xf32, #tpu.memory_space<vmem>>, vector<1x1x16x3xf32>
    %3 = vector.shape_cast %2 : vector<1x1x16x3xf32> to vector<16x3xf32>
    %4 = vector.extract_strided_slice %3 {offsets = [0, 0], sizes = [16, 1], strides = [1, 1]} : vector<16x3xf32> to vector<16x1xf32>
    %c0_6 = arith.constant 0 : index
    %c0_7 = arith.constant 0 : index
    %5 = vector.load %arg7[%c0_6, %c0_7] : memref<64x16xf32, #tpu.memory_space<vmem>>, vector<16x1xf32>
    tpu.vector_store %arg7[%c0_6, %c0_7], %4 {strides = array<i32>} : memref<64x16xf32, #tpu.memory_space<vmem>>, vector<16x1xf32>,
    %6 = vector.extract_strided_slice %1 {offsets = [0, 0], sizes = [16, 15], strides = [1, 1]} : vector<16x16xf32> to vector<16x15xf32>
    %c0_8 = arith.constant 0 : index
    %c1 = arith.constant 1 : index
    %7 = vector.load %arg7[%c0_8, %c1] : memref<64x16xf32, #tpu.memory_space<vmem>>, vector<16x15xf32>
    tpu.vector_store %arg7[%c0_8, %c1], %6 {strides = array<i32>} : memref<64x16xf32, #tpu.memory_space<vmem>>, vector<16x15xf32>,
    %c16 = arith.constant 16 : index
    %c0_9 = arith.constant 0 : index
    %8 = vector.load %arg7[%c16, %c0_9] : memref<64x16xf32, #tpu.memory_space<vmem>>, vector<16x16xf32>
    tpu.vector_store %arg7[%c16, %c0_9], %1 {strides = array<i32>} : memref<64x16xf32, #tpu.memory_space<vmem>>, vector<16x16xf32>,
    %9 = vector.extract_strided_slice %1 {offsets = [0, 1], sizes = [16, 15], strides = [1, 1]} : vector<16x16xf32> to vector<16x15xf32>
    %c32 = arith.constant 32 : index
    %c0_10 = arith.constant 0 : index
    %10 = vector.load %arg7[%c32, %c0_10] : memref<64x16xf32, #tpu.memory_space<vmem>>, vector<16x15xf32>
    tpu.vector_store %arg7[%c32, %c0_10], %9 {strides = array<i32>} : memref<64x16xf32, #tpu.memory_space<vmem>>, vector<16x15xf32>,
    %11 = vector.extract_strided_slice %3 {offsets = [0, 1], sizes = [16, 1], strides = [1, 1]} : vector<16x3xf32> to vector<16x1xf32>
    %c32_11 = arith.constant 32 : index
    %c15 = arith.constant 15 : index
    %12 = vector.load %arg7[%c32_11, %c15] : memref<64x16xf32, #tpu.memory_space<vmem>>, vector<16x1xf32>
    tpu.vector_store %arg7[%c32_11, %c15], %11 {strides = array<i32>} : memref<64x16xf32, #tpu.memory_space<vmem>>, vector<16x1xf32>,
    %13 = vector.extract_strided_slice %1 {offsets = [0, 2], sizes = [16, 14], strides = [1, 1]} : vector<16x16xf32> to vector<16x14xf32>
    %c48 = arith.constant 48 : index
    %c0_12 = arith.constant 0 : index
    %14 = vector.load %arg7[%c48, %c0_12] : memref<64x16xf32, #tpu.memory_space<vmem>>, vector<16x14xf32>
    tpu.vector_store %arg7[%c48, %c0_12], %13 {strides = array<i32>} : memref<64x16xf32, #tpu.memory_space<vmem>>, vector<16x14xf32>,
    %15 = vector.extract_strided_slice %3 {offsets = [0, 1], sizes = [16, 2], strides = [1, 1]} : vector<16x3xf32> to vector<16x2xf32>
    %c48_13 = arith.constant 48 : index
    %c14 = arith.constant 14 : index
    %16 = vector.load %arg7[%c48_13, %c14] : memref<64x16xf32, #tpu.memory_space<vmem>>, vector<16x2xf32>
    tpu.vector_store %arg7[%c48_13, %c14], %15 {strides = array<i32>} : memref<64x16xf32, #tpu.memory_space<vmem>>, vector<16x2xf32>,
    %c0_14 = arith.constant 0 : index
    %c0_15 = arith.constant 0 : index
    %17 = vector.load %arg4[%c0_14, %c0_15] : memref<16x64xf32, #tpu.memory_space<vmem>>, vector<16x64xf32>
    %c0_16 = arith.constant 0 : index
    %c0_17 = arith.constant 0 : index
    %18 = vector.load %arg7[%c0_16, %c0_17] : memref<64x16xf32, #tpu.memory_space<vmem>>, vector<64x16xf32>
    %cst = arith.constant dense<0.000000e+00> : vector<16x16xf32>
    %19 = tpu.matmul %17, %18, %cst {dimension_numbers = #tpu.dot_dimension_numbers<[1], [0], [0], [1], [0, 0, 1, 1], [], []>} : vector<16x64xf32>, vector<64x16xf32>, vector<16x16xf32> -> vector<16x16xf32>
    %c0_18 = arith.constant 0 : index
    %c0_19 = arith.constant 0 : index
    %20 = vector.load %arg5[%c0_18, %c0_19] : memref<16x1xf32, #tpu.memory_space<vmem>>, vector<16x1xf32>
    %21 = vector.broadcast %20 : vector<16x1xf32> to vector<16x16xf32>
    %22 = arith.addf %19, %21 : vector<16x16xf32>
    %cst_20 = arith.constant 0.000000e+00 : f32
    %23 = vector.broadcast %cst_20 : f32 to vector<16x16xf32>
    %24 = arith.maximumf %22, %23 : vector<16x16xf32>
    %25 = arith.addf %24, %1 : vector<16x16xf32>
    %c0_21 = arith.constant 0 : index
    %c0_22 = arith.constant 0 : index
    %c0_23 = arith.constant 0 : index
    %26 = vector.load %arg6[%c0_21, %c0_22, %c0_23] : memref<1x16x16xf32, #tpu.memory_space<vmem>>, vector<1x16x16xf32>
    %27 = vector.shape_cast %26 : vector<1x16x16xf32> to vector<16x16xf32>
    %28 = vector.shape_cast %25 : vector<16x16xf32> to vector<1x16x16xf32>
    tpu.vector_store %arg6[%c0_21, %c0_22, %c0_23], %28 {strides = array<i32>} : memref<1x16x16xf32, #tpu.memory_space<vmem>>, vector<1x16x16xf32>,
    return
  }
  func.func @transform_0(%arg0: i32, %arg1: i32) -> (i32, i32, i32) {
    %c0_i32 = arith.constant 0 : i32
    %c0_i32_0 = arith.constant 0 : i32
    return %arg0, %c0_i32, %arg1 : i32, i32, i32
  }
  func.func @transform_1(%arg0: i32, %arg1: i32) -> (i32, i32, i32, i32) {
    %c0_i32 = arith.constant 0 : i32
    %c0_i32_0 = arith.constant 0 : i32
    %c0_i32_1 = arith.constant 0 : i32
    return %arg1, %arg0, %c0_i32, %c0_i32_0 : i32, i32, i32, i32
  }
  func.func @transform_2(%arg0: i32, %arg1: i32) -> (i32, i32) {
    %c0_i32 = arith.constant 0 : i32
    %c0_i32_0 = arith.constant 0 : i32
    %c0_i32_1 = arith.constant 0 : i32
    return %c0_i32, %c0_i32_0 : i32, i32
  }
  func.func @transform_3(%arg0: i32, %arg1: i32) -> (i32, i32) {
    %c0_i32 = arith.constant 0 : i32
    %c0_i32_0 = arith.constant 0 : i32
    %c0_i32_1 = arith.constant 0 : i32
    return %c0_i32, %c0_i32_0 : i32, i32
  }
  func.func @transform_4(%arg0: i32, %arg1: i32) -> (i32, i32, i32) {
    %c0_i32 = arith.constant 0 : i32
    %c0_i32_0 = arith.constant 0 : i32
    return %arg0, %c0_i32, %arg1 : i32, i32, i32
  }
}

</mosaic_0001>

<llo_original>
// kernel: tpu_custom_call.1
$region0: #{tpu_custom_call.1}
  #allocation0 [shape = 'u32[]', space=smem, size = 0x4, offset = 0x4, fixed_abs, tag = 'smem constant byte address 0x4 - core index']
  #allocation1 [shape = 'u32[144,128]{1,0:T(1,128)}', space=vmem, size = 0x12000, scoped, tag = 'internal scratch']
  #allocation2 [shape = 'f32[64,16]{1,0:T(8,128)}', space=vmem, size = 0x8000, scoped, tag = 'scratch operand']
  %s0 = inlined_call_operand.vmem [shape: f32[2,16,16], index: 0, kind: input, shape index: {}]
  %s1 = inlined_call_operand.vmem [shape: f32[1,2,16,3], index: 1, kind: input, shape index: {}]
  %s2 = inlined_call_operand.vmem [shape: f32[16,64], index: 2, kind: input, shape index: {}]
  %s3 = inlined_call_operand.vmem [shape: f32[16,1], index: 3, kind: input, shape index: {}]
  %s4 = inlined_call_operand.hbm [shape: f32[2,16,16], index: 4, kind: output, shape index: {}]
  %s5 = sld [smem:[#allocation0]]
  $region49: #{tpu_custom_call.1} parent=0
    _
  %s7 = ssub.s32 1, %s5
  %s8 = scalar_select 0, %s7, %s5
  $region1: #{tpu_custom_call.1} parent=0
    #allocation3 [shape = 'u8[16384]{0}', space=vmem, size = 0x4000, scoped, tag = 'output window, operand 0']
    #allocation4 [shape = 's32[2]{0}', space=sflag, size = 0x8, scoped, tag = 'scoped memory for tpu_custom_call.1']
    %9 = vsyncpa [#allocation4], 0
    %s10 = scalar_lea.sflag [#allocation4], 1
    %11 = vsyncpa %s10, 0
    loop: start=0, step=1, limit=4
    $region2: #{tpu_custom_call.1} parent=1 // loop_pre_header
      _
    $region3: #{tpu_custom_call.1} parent=1 // loop_header
      %s13 = sphi 0, %s17
      %p14 = scmp.ge.s32.totalorder %s13, 4
      %s20 = sphi 0, %s32
      %s21 = sphi 0, %s28
      %s22 = sphi 0, %s20
      %s23 = sphi 0, %s21
      %s24 = sphi 0, %s22
      %s25 = sphi 0, %s23
      %s37 = sphi 0, %s39
      %s40 = sphi 0, %s37
      %s41 = sphi 0, %s40
      %s57 = sphi 0, %s41
      %s65 = sphi 0, %s67
      %s68 = sphi 0, %s65
      %s69 = sphi 0, %s68
      %s85 = sphi 0, %s69
      %s89 = sphi 0, %s89
      %s91 = sphi 0, %s89
      %s92 = sphi 0, %s91
      %s106 = sphi 0, %s92
      %s110 = sphi 0, %s110
      %s112 = sphi 0, %s110
      %s113 = sphi 0, %s112
      %s127 = sphi 0, %s113
      %s135 = sphi 0, %s137
      %s138 = sphi 0, %s135
      %s139 = sphi 0, %s138
      %s155 = sphi 0, %s139
    $region4: #{tpu_custom_call.1} parent=1 // loop_header_branch
      %16 = sbr.rel (%p14) target = $region8
    $region5: #{tpu_custom_call.1} parent=1 // loop_body
      %s18 = ssub.s32 %s13, 1
      %s19 = ssub.s32 %s13, 2
      %s26 = sadd.s32 1, %s21
      %p27 = scmp.ge.s32.totalorder %s26, 1
      %s28 = scalar_select %p27, 0, %s26
      %s29 = sadd.s32 1, %s20
      %s30 = scalar_select %p27, %s29, %s20
      %p31 = scmp.ge.s32.totalorder %s30, 2
      %s32 = scalar_select %p31, 0, %s30
      %s33 = ssub.s32 %s20, %s32
      %s34 = ssub.s32 %s21, %s28
      %s35 = sor.u32 %s33, %s34
      %p36 = scmp.eq.s32.totalorder %s35, 0
      %s38 = sadd.s32 %s37, 1
      %s39 = scalar_select %p36, %s37, %s38
      %p42 = pneg %p36
      %p43 = scmp.eq.s32.totalorder %s13, 1
      %p44 = por %p42, %p43
      %p45 = scmp.ne.s32.totalorder %s37, %s40
      %p46 = scmp.eq.s32.totalorder %s13, 0
      %p47 = por %p45, %p46
      %p48 = scmp.ne.s32.totalorder %s37, %s40
      %p49 = scmp.eq.s32.totalorder %s18, 1
      %p50 = por %p48, %p49
      %p51 = scmp.ne.s32.totalorder %s40, %s41
      %p52 = scmp.eq.s32.totalorder %s18, 0
      %p53 = por %p51, %p52
      %p54 = scmp.ne.s32.totalorder %s40, %s41
      %p55 = scmp.eq.s32.totalorder %s19, 1
      %p56 = por %p54, %p55
      %p58 = scmp.ne.s32.totalorder %s41, %s57
      %p59 = scmp.eq.s32.totalorder %s19, 0
      %p60 = por %p58, %p59
      %s61 = ssub.s32 %s21, %s28
      %s62 = ssub.s32 %s20, %s32
      %s63 = sor.u32 %s61, %s62
      %p64 = scmp.eq.s32.totalorder %s63, 0
      %s66 = sadd.s32 %s65, 1
      %s67 = scalar_select %p64, %s65, %s66
      %p70 = pneg %p64
      %p71 = scmp.eq.s32.totalorder %s13, 1
      %p72 = por %p70, %p71
      %p73 = scmp.ne.s32.totalorder %s65, %s68
      %p74 = scmp.eq.s32.totalorder %s13, 0
      %p75 = por %p73, %p74
      %p76 = scmp.ne.s32.totalorder %s65, %s68
      %p77 = scmp.eq.s32.totalorder %s18, 1
      %p78 = por %p76, %p77
      %p79 = scmp.ne.s32.totalorder %s68, %s69
      %p80 = scmp.eq.s32.totalorder %s18, 0
      %p81 = por %p79, %p80
      %p82 = scmp.ne.s32.totalorder %s68, %s69
      %p83 = scmp.eq.s32.totalorder %s19, 1
      %p84 = por %p82, %p83
      %p86 = scmp.ne.s32.totalorder %s69, %s85
      %p87 = scmp.eq.s32.totalorder %s19, 0
      %p88 = por %p86, %p87
      %s90 = sadd.s32 %s89, 1
      %p93 = scmp.eq.s32.totalorder %s13, 1
      %p94 = scmp.ne.s32.totalorder %s89, %s91
      %p95 = scmp.eq.s32.totalorder %s13, 0
      %p96 = por %p94, %p95
      %p97 = scmp.ne.s32.totalorder %s89, %s91
      %p98 = scmp.eq.s32.totalorder %s18, 1
      %p99 = por %p97, %p98
      %p100 = scmp.ne.s32.totalorder %s91, %s92
      %p101 = scmp.eq.s32.totalorder %s18, 0
      %p102 = por %p100, %p101
      %p103 = scmp.ne.s32.totalorder %s91, %s92
      %p104 = scmp.eq.s32.totalorder %s19, 1
      %p105 = por %p103, %p104
      %p107 = scmp.ne.s32.totalorder %s92, %s106
      %p108 = scmp.eq.s32.totalorder %s19, 0
      %p109 = por %p107, %p108
      %s111 = sadd.s32 %s110, 1
      %p114 = scmp.eq.s32.totalorder %s13, 1
      %p115 = scmp.ne.s32.totalorder %s110, %s112
      %p116 = scmp.eq.s32.totalorder %s13, 0
      %p117 = por %p115, %p116
      %p118 = scmp.ne.s32.totalorder %s110, %s112
      %p119 = scmp.eq.s32.totalorder %s18, 1
      %p120 = por %p118, %p119
      %p121 = scmp.ne.s32.totalorder %s112, %s113
      %p122 = scmp.eq.s32.totalorder %s18, 0
      %p123 = por %p121, %p122
      %p124 = scmp.ne.s32.totalorder %s112, %s113
      %p125 = scmp.eq.s32.totalorder %s19, 1
      %p126 = por %p124, %p125
      %p128 = scmp.ne.s32.totalorder %s113, %s127
      %p129 = scmp.eq.s32.totalorder %s19, 0
      %p130 = por %p128, %p129
      %s131 = ssub.s32 %s20, %s32
      %s132 = ssub.s32 %s21, %s28
      %s133 = sor.u32 %s131, %s132
      %p134 = scmp.eq.s32.totalorder %s133, 0
      %s136 = sadd.s32 %s135, 1
      %s137 = scalar_select %p134, %s135, %s136
      %p140 = pneg %p134
      %p141 = scmp.eq.s32.totalorder %s13, 1
      %p142 = por %p140, %p141
      %p143 = scmp.ne.s32.totalorder %s135, %s138
      %p144 = scmp.eq.s32.totalorder %s13, 0
      %p145 = por %p143, %p144
      %p146 = scmp.ne.s32.totalorder %s135, %s138
      %p147 = scmp.eq.s32.totalorder %s18, 1
      %p148 = por %p146, %p147
      %p149 = scmp.ne.s32.totalorder %s138, %s139
      %p150 = scmp.eq.s32.totalorder %s18, 0
      %p151 = por %p149, %p150
      %p152 = scmp.ne.s32.totalorder %s138, %s139
      %p153 = scmp.eq.s32.totalorder %s19, 1
      %p154 = por %p152, %p153
      %p156 = scmp.ne.s32.totalorder %s139, %s155
      %p157 = scmp.eq.s32.totalorder %s19, 0
      %p158 = por %p156, %p157
      %p159 = scmp.le.s32.totalorder 1, %s13
      %p160 = scmp.lt.s32.totalorder %s13, 3
      %p161 = pnand %p159, %p160
      %p162 = pneg %p161
      // Predicated region
      $region9: #{tpu_custom_call.1} parent=5 // pred_check
        _
      $region10: #{tpu_custom_call.1} parent=5 // pred_check_branch
        %164 = sbr.rel (%p161) target = $region12
      $region11: #{tpu_custom_call.1} parent=5 // pred_region
        %s165 = ssub.s32 %s13, 1
        // Predicated region
        $region13: #{tpu_custom_call.1} parent=11 // pred_check
          %p166 = pneg %p102
        $region14: #{tpu_custom_call.1} parent=11 // pred_check_branch
          %168 = sbr.rel (%p166) target = $region16
        $region15: #{tpu_custom_call.1} parent=11 // pred_region
          _
        $region16: #{tpu_custom_call.1} parent=11 // pred_fallthru
          _
        // Predicated region
        $region17: #{tpu_custom_call.1} parent=11 // pred_check
          %p169 = pneg %p123
        $region18: #{tpu_custom_call.1} parent=11 // pred_check_branch
          %171 = sbr.rel (%p169) target = $region20
        $region19: #{tpu_custom_call.1} parent=11 // pred_region
          _
        $region20: #{tpu_custom_call.1} parent=11 // pred_fallthru
          _
      $region12: #{tpu_custom_call.1} parent=5 // pred_fallthru
        _
      %p172 = scmp.lt.s32.totalorder %s13, 2
      // Predicated region
      $region21: #{tpu_custom_call.1} parent=5 // pred_check
        %p173 = pneg %p172
      $region22: #{tpu_custom_call.1} parent=5 // pred_check_branch
        %175 = sbr.rel (%p173) target = $region24
      $region23: #{tpu_custom_call.1} parent=5 // pred_region
        // Predicated region
        $region25: #{tpu_custom_call.1} parent=23 // pred_check
          %p176 = pneg %p47
        $region26: #{tpu_custom_call.1} parent=23 // pred_check_branch
          %178 = sbr.rel (%p176) target = $region28
        $region27: #{tpu_custom_call.1} parent=23 // pred_region
          %p179 = scmp.lt.s32.totalorder %s20, 1
          %s180 = scalar_select %p179, %s20, 1
          %p181 = scmp.lt.s32.totalorder %s21, 0
          %s182 = scalar_select %p181, %s21, 0
          %s183 = smul.addr %s180, 2
          %s184 = sadd.s32 %s182, %s183
          %s185 = smul.addr %s184, 8
          %s186 = scalar_lea.vmem %s0, %s185
        $region28: #{tpu_custom_call.1} parent=23 // pred_fallthru
          _
        // Predicated region
        $region29: #{tpu_custom_call.1} parent=23 // pred_check
          %p187 = pneg %p75
        $region30: #{tpu_custom_call.1} parent=23 // pred_check_branch
          %189 = sbr.rel (%p187) target = $region32
        $region31: #{tpu_custom_call.1} parent=23 // pred_region
          %p190 = scmp.lt.s32.totalorder %s21, 0
          %s191 = scalar_select %p190, %s21, 0
          %p192 = scmp.lt.s32.totalorder %s20, 1
          %s193 = scalar_select %p192, %s20, 1
          %s194 = smul.addr %s193, 2
          %s195 = smul.addr %s191, 4
          %s196 = sadd.s32 %s194, %s195
          %s197 = smul.addr %s196, 8
          %s198 = scalar_lea.vmem %s1, %s197
        $region32: #{tpu_custom_call.1} parent=23 // pred_fallthru
          _
      $region24: #{tpu_custom_call.1} parent=5 // pred_fallthru
        _
      %p199 = scmp.le.s32.totalorder 1, %s13
      %p200 = scmp.lt.s32.totalorder %s13, 3
      %p201 = pnand %p199, %p200
      %p202 = pneg %p201
      // Predicated region
      $region33: #{tpu_custom_call.1} parent=5 // pred_check
        _
      $region34: #{tpu_custom_call.1} parent=5 // pred_check_branch
        %204 = sbr.rel (%p201) target = $region36
      $region35: #{tpu_custom_call.1} parent=5 // pred_region
        %s205 = ssub.s32 %s13, 1
        %p206 = scmp.lt.s32.totalorder %s22, 1
        %s207 = scalar_select %p206, %s22, 1
        %p208 = scmp.lt.s32.totalorder %s23, 0
        %s209 = scalar_select %p208, %s23, 0
        %s210 = smul.addr %s207, 2
        %s211 = sadd.s32 %s209, %s210
        %s212 = smul.addr %s211, 8
        %s213 = scalar_lea.vmem %s0, %s212
        %p214 = pneg %p53
        %p215 = pneg %p50
        %p216 = scmp.lt.s32.totalorder %s23, 0
        %s217 = scalar_select %p216, %s23, 0
        %p218 = scmp.lt.s32.totalorder %s22, 1
        %s219 = scalar_select %p218, %s22, 1
        %s220 = smul.addr %s219, 2
        %s221 = smul.addr %s217, 4
        %s222 = sadd.s32 %s220, %s221
        %s223 = smul.addr %s222, 8
        %s224 = scalar_lea.vmem %s1, %s223
        %p225 = pneg %p81
        %p226 = pneg %p78
        %p227 = pneg %p102
        %p228 = pneg %p99
        %p229 = pneg %p123
        %p230 = pneg %p120
        %p231 = pneg %p151
        %p232 = pneg %p148
        %s233 = sand.u32 %s138, 1
        %s234 = scalar_lea.sflag [#allocation4], %s233
        %s235 = sand.u32 %s138, 1
        %s236 = smul.addr %s235, 16
        %s237 = scalar_lea.vmem [#allocation3], %s236
        %p238 = scmp.lt.s32.totalorder %s22, 1
        %s239 = scalar_select %p238, %s22, 1
        %p240 = scmp.lt.s32.totalorder %s23, 0
        %s241 = scalar_select %p240, %s23, 0
        %s242 = smul.addr %s239, 2
        %s243 = sadd.s32 %s241, %s242
        %s244 = smul.addr %s243, 8
        %s245 = scalar_lea.vmem %s0, %s244
        %p246 = scmp.lt.s32.totalorder %s23, 0
        %s247 = scalar_select %p246, %s23, 0
        %p248 = scmp.lt.s32.totalorder %s22, 1
        %s249 = scalar_select %p248, %s22, 1
        %s250 = smul.addr %s249, 2
        %s251 = smul.addr %s247, 4
        %s252 = sadd.s32 %s250, %s251
        %s253 = smul.addr %s252, 8
        %s254 = scalar_lea.vmem %s1, %s253
        %v255 = vld [vmem:[%s245] sm:$0xff]
        %v256 = vld [vmem:[%s245 + $0x8] sm:$0xff]
        %v257 = vld [vmem:[%s254] sm:$0xff]
        %v258 = vld [vmem:[%s254 + $0x8] sm:$0xff]
        %vm259 = vcmask 7168
        %260 = vst.msk [vmem:[#allocation2] sm:$0xff] %vm259, %v257
        %261 = vst.msk [vmem:[#allocation2 + $0x8] sm:$0xff] %vm259, %v258
        %264 = vrot.lane.b32.xlu0 %v255, 1
        %v265 = vpop.permute.xlu0 %264
        %266 = vrot.lane.b32.xlu0 %v256, 1
        %v267 = vpop.permute.xlu0 %266
        %vm270 = vcmask 130056
        %271 = vst.msk [vmem:[#allocation2] sm:$0xff] %vm270, %v265
        %272 = vst.msk [vmem:[#allocation2 + $0x8] sm:$0xff] %vm270, %v267
        %vm273 = vcmask 130048
        %274 = vst.msk [vmem:[#allocation2 + $0x10] sm:$0xff] %vm273, %v255
        %275 = vst.msk [vmem:[#allocation2 + $0x18] sm:$0xff] %vm273, %v256
        %276 = vrot.lane.b32.xlu0 %v255, 127
        %v277 = vpop.permute.xlu0 %276
        %278 = vrot.lane.b32.xlu0 %v256, 127
        %v279 = vpop.permute.xlu0 %278
        %vm282 = vcmask 121856
        %283 = vst.msk [vmem:[#allocation2 + $0x20] sm:$0xff] %vm282, %v277
        %284 = vst.msk [vmem:[#allocation2 + $0x28] sm:$0xff] %vm282, %v279
        %287 = vrot.lane.b32.xlu0 %v257, 14
        %v288 = vpop.permute.xlu0 %287
        %289 = vrot.lane.b32.xlu0 %v258, 14
        %v290 = vpop.permute.xlu0 %289
        %vm293 = vcmask 130168
        %294 = vst.msk [vmem:[#allocation2 + $0x20] sm:$0xff] %vm293, %v288
        %295 = vst.msk [vmem:[#allocation2 + $0x28] sm:$0xff] %vm293, %v290
        %296 = vrot.lane.b32.xlu0 %v255, 126
        %v297 = vpop.permute.xlu0 %296
        %298 = vrot.lane.b32.xlu0 %v256, 126
        %v299 = vpop.permute.xlu0 %298
        %vm302 = vcmask 113664
        %303 = vst.msk [vmem:[#allocation2 + $0x30] sm:$0xff] %vm302, %v297
        %304 = vst.msk [vmem:[#allocation2 + $0x38] sm:$0xff] %vm302, %v299
        %305 = vrot.lane.b32.xlu0 %v257, 13
        %v306 = vpop.permute.xlu0 %305
        %307 = vrot.lane.b32.xlu0 %v258, 13
        %v308 = vpop.permute.xlu0 %307
        %vm311 = vcmask 130160
        %312 = vst.msk [vmem:[#allocation2 + $0x30] sm:$0xff] %vm311, %v306
        %313 = vst.msk [vmem:[#allocation2 + $0x38] sm:$0xff] %vm311, %v308
        %v314 = vld [vmem:[%s2] sm:$0xff]
        %v315 = vld [vmem:[%s2 + $0x8] sm:$0xff]
        %v316 = vld [vmem:[#allocation2] sm:$0xff]
        %v317 = vld [vmem:[#allocation2 + $0x8] sm:$0xff]
        %v318 = vld [vmem:[#allocation2 + $0x10] sm:$0xff]
        %v319 = vld [vmem:[#allocation2 + $0x18] sm:$0xff]
        %v320 = vld [vmem:[#allocation2 + $0x20] sm:$0xff]
        %v321 = vld [vmem:[#allocation2 + $0x28] sm:$0xff]
        %v322 = vld [vmem:[#allocation2 + $0x30] sm:$0xff]
        %v323 = vld [vmem:[#allocation2 + $0x38] sm:$0xff]
        %v324 = vld [vmem:[%s3] sm:$0xff]
        %v325 = vld [vmem:[%s3 + $0x8] sm:$0xff]
        %327 = vset.pattern.permute.xlu0 0
        %328 = vperm.xlu0 %327, %v324
        %v329 = vpop.permute.xlu0 %328
        %332 = vset.pattern.permute.xlu0 0
        %333 = vperm.xlu0 %332, %v325
        %v334 = vpop.permute.xlu0 %333
        %vm336 = vcmask 523264
        %v338 = vsel %vm336, %v314, 0
        %v341 = vsel %vm336, %v315, 0
        %343 = vmatprep.subr.mxu0 0.0
        %344 = vmatpush1.msra.mxu0 %v316
        %345 = vmatprep.subr.mxu0 0.0
        %346 = vmatpush1.msra.mxu0 %v317
        %347 = vmatprep.subr.mxu0 0.0
        %348 = vmatpush1.msra.mxu0 %v318
        %349 = vmatprep.subr.mxu0 0.0
        %350 = vmatpush1.msra.mxu0 %v319
        %351 = vmatprep.subr.mxu0 0.0
        %352 = vmatpush1.msra.mxu0 %v320
        %353 = vmatprep.subr.mxu0 0.0
        %354 = vmatpush1.msra.mxu0 %v321
        %355 = vmatprep.subr.mxu0 0.0
        %356 = vmatpush1.msra.mxu0 %v322
        %357 = vmatprep.subr.mxu0 0.0
        %358 = vmatpush1.msra.mxu0 %v323
        %359 = vmatprep.subr.mxu0 0.0
        %360 = vmatpush1.msra.mxu0 0.0
        %361 = vmatprep.subr.mxu0 0.0
        %362 = vmatpush1.msra.mxu0 0.0
        %363 = vmatprep.subr.mxu0 0.0
        %364 = vmatpush1.msra.mxu0 0.0
        %365 = vmatprep.subr.mxu0 0.0
        %366 = vmatpush1.msra.mxu0 0.0
        %367 = vmatprep.subr.mxu0 0.0
        %368 = vmatpush1.msra.mxu0 0.0
        %369 = vmatprep.subr.mxu0 0.0
        %370 = vmatpush1.msra.mxu0 0.0
        %371 = vmatprep.subr.mxu0 0.0
        %372 = vmatpush1.msra.mxu0 0.0
        %373 = vmatprep.subr.mxu0 0.0
        %374 = vmatpush1.msra.mxu0 0.0
        %375 = vmatprep.subr.mxu0 0.0
        %376 = vmatpush1.msra.mxu0 0.0
        %377 = vmatprep.subr.mxu0 0.0
        %378 = vmatpush1.msra.mxu0 0.0
        %379 = vmatprep.subr.mxu0 0.0
        %380 = vmatpush1.msra.mxu0 0.0
        %381 = vmatprep.subr.mxu0 0.0
        %382 = vmatpush1.msra.mxu0 0.0
        %383 = vmatprep.subr.mxu0 0.0
        %384 = vmatpush1.msra.mxu0 0.0
        %385 = vmatprep.subr.mxu0 0.0
        %386 = vmatpush1.msra.mxu0 0.0
        %387 = vmatprep.subr.mxu0 0.0
        %388 = vmatpush1.msra.mxu0 0.0
        %389 = vmatprep.subr.mxu0 0.0
        %390 = vmatpush1.msra.mxu0 0.0
        %391 = vmatprep.subr.mxu0 0.0
        %392 = vmatpush1.msra.mxu0 0.0
        %393 = vmatprep.subr.mxu0 0.0
        %394 = vmatpush1.msra.mxu0 0.0
        %395 = vmatprep.subr.mxu0 0.0
        %396 = vmatpush1.msra.mxu0 0.0
        %397 = vmatprep.subr.mxu0 0.0
        %398 = vmatpush1.msra.mxu0 0.0
        %399 = vmatprep.subr.mxu0 0.0
        %400 = vmatpush1.msra.mxu0 0.0
        %401 = vmatprep.subr.mxu0 0.0
        %402 = vmatpush1.msra.mxu0 0.0
        %403 = vmatprep.subr.mxu0 0.0
        %404 = vmatpush1.msra.mxu0 0.0
        %405 = vmatprep.subr.mxu0 0.0
        %406 = vmatpush1.msra.mxu0 0.0
        %407 = vmatprep.mubr.f32.mxu0 0.0
        %408 = vmatmul.mubr.f32.gmra.mrb[0].mxu0 %v338
        %v409 = vpop.f32.mrb[0].mxu0
        %v410 = vadd.f32 %v329, %v409
        %v411 = vpop.f32.mrb[0].mxu0
        %412 = vmatprep.mubr.f32.mxu0 0.0
        %413 = vmatmul.mubr.f32.gmra.mrb[0].mxu0 %v341
        %v414 = vpop.f32.mrb[0].mxu0
        %v415 = vadd.f32 %v334, %v414
        %v416 = vpop.f32.mrb[0].mxu0
        %417 = vdwg.mxu0
        %v418 = vmax.f32 %v410, 0.0
        %v419 = vmax.f32 %v415, 0.0
        %v420 = vadd.f32 %v418, %v255
        %v421 = vadd.f32 %v419, %v256
        %422 = vst.msk [vmem:[%s237] sm:$0xff] %vm273, %v420
        %423 = vst.msk [vmem:[%s237 + $0x8] sm:$0xff] %vm273, %v421
        %s424 = sand.u32 %s138, 1
        %s425 = scalar_lea.sflag [#allocation4], %s424
        %s426 = sand.u32 %s138, 1
        %s427 = smul.addr %s426, 16
        %s428 = scalar_lea.vmem [#allocation3], %s427
        // Predicated region
        $region37: #{tpu_custom_call.1} parent=35 // pred_check
          %p429 = pneg %p148
        $region38: #{tpu_custom_call.1} parent=35 // pred_check_branch
          %431 = sbr.rel (%p429) target = $region40
        $region39: #{tpu_custom_call.1} parent=35 // pred_region
          %s433 = ssub.s32 256, 256
          %434 = vsyncadd %s425, %s433
          %s435 = smul.addr %s22, 2
          %s436 = sadd.s32 %s23, %s435
          %s437 = smul.addr %s436, 128
          %s438 = scalar_lea.hbm %s4, %s437
          %s439 = sshll.u32 %s428, 4
          %s440 = int_to_ptr.vmem [resolvable:$true] %s439
          %445 = dma.vmem_to_hbm [thread:$0]  %s440, 256, %s438, %s425, 128, 128, 8
        $region40: #{tpu_custom_call.1} parent=35 // pred_fallthru
          _
      $region36: #{tpu_custom_call.1} parent=5 // pred_fallthru
        _
      %p446 = scmp.le.s32.totalorder 2, %s13
      // Predicated region
      $region41: #{tpu_custom_call.1} parent=5 // pred_check
        %p447 = pneg %p446
      $region42: #{tpu_custom_call.1} parent=5 // pred_check_branch
        %449 = sbr.rel (%p447) target = $region44
      $region43: #{tpu_custom_call.1} parent=5 // pred_region
        %s450 = ssub.s32 %s13, 2
        // Predicated region
        $region45: #{tpu_custom_call.1} parent=43 // pred_check
          %p451 = pneg %p154
        $region46: #{tpu_custom_call.1} parent=43 // pred_check_branch
          %453 = sbr.rel (%p451) target = $region48
        $region47: #{tpu_custom_call.1} parent=43 // pred_region
          %s454 = sand.u32 %s139, 1
          %s455 = scalar_lea.sflag [#allocation4], %s454
          %s456 = sand.u32 %s139, 1
          %s457 = smul.addr %s456, 16
          %s458 = scalar_lea.vmem [#allocation3], %s457
          %459 = dma.done %s455, 256
        $region48: #{tpu_custom_call.1} parent=43 // pred_fallthru
          _
      $region44: #{tpu_custom_call.1} parent=5 // pred_fallthru
        _
    $region6: #{tpu_custom_call.1} parent=1 // loop_footer
      %s17 = sadd.s32 1, %s13
    $region7: #{tpu_custom_call.1} parent=1 // loop_footer_branch
      %12 = sbr.rel target = $region3
    $region8: #{tpu_custom_call.1} parent=1 // loop_exit
      _
    %460 = vsyncpa [#allocation4], 1
    %s461 = scalar_lea.sflag [#allocation4], 1
    %462 = vsyncpa %s461, 1

</llo_original>
